<compile_context>
chip_gen: v5e
topology: v5e:2x2
jax: 0.10.0
libtpu: 0.0.40
codegen_flags: <defaults>
</compile_context>

<pallas_src>
import numpy as np
import jax
import jax.numpy as jnp
from jax import lax
from jax.experimental import pallas as pl
from jax.experimental.pallas import tpu as pltpu


def _vmem_limit_bytes():
    """Generation-aware VMEM limit: 3/4 of physical, capped at 96 MiB.

    v5e/v6e (128 MiB physical) -> 96 MiB, v7x (64 MiB physical) -> 48 MiB,
    leaving headroom for compiler-internal scratch.
    """
    try:
        cap = pltpu.get_tpu_info().vmem_capacity_bytes
    except Exception:
        cap = 64 * 1024 * 1024
    return int(min(cap * 3 // 4, 96 * 1024 * 1024))


def _pick_tm(H, W, per_col_bytes, budget_bytes):
    """Largest multiple-of-128 tile of the flattened output spatial dim
    Q = (2H)*(2W) that divides Q and fits the VMEM budget.  Falls back to
    whole-output-row tiles (width 4W) when Q has no usable 128-multiple
    divisor (e.g. H = W = 28)."""
    Q = 4 * H * W
    for tm in (16384, 8192, 4096, 2048, 1024, 512, 256, 128):
        if Q % tm == 0 and tm * per_col_bytes <= budget_bytes:
            return tm
    for th in range(H, 0, -1):
        if H % th == 0 and th * 4 * W * per_col_bytes <= budget_bytes:
            return th * 4 * W
    return 4 * W


def upconv_forward(x, output_down, weight, bias):
    """ConvTranspose2d(k=2, s=2)(x), concatenated after output_down along dim 1.

    x           : (N, Cin, H, W)        NCHW
    output_down : (N, Cdown, 2H, 2W)    NCHW
    weight      : (Cin, Cout, 2, 2)     PyTorch ConvTranspose2d layout
    bias        : (Cout,)
    returns     : (N, Cdown + Cout, 2H, 2W)
    """
    N, Cin, H, W = x.shape
    Cout = weight.shape[1]
    Cdown = output_down.shape[1]
    Ctot = Cdown + Cout
    Q = 4 * H * W                       # flattened (2H, 2W) output extent
    out_dtype = output_down.dtype

    # --- bf16 MXU inputs (accumulation stays f32 in-kernel) -----------------
    xb = x.astype(jnp.bfloat16)
    # xq[n, ci, q] = x[n, ci, q // (4W), (q % 2W) // 2]
    # i.e. x expanded so matmul column q already matches final output position
    # q = (2i+ki)*2W + 2j+kj (cheap: x is the small tensor of this op).
    xr = jnp.repeat(xb, 2, axis=3)                                    # (N,Cin,H,2W)
    xq = jnp.broadcast_to(xr[:, :, :, None, :], (N, Cin, H, 2, 2 * W))
    xq = xq.reshape(N, Cin, Q)                                        # (N,Cin,Q)

    # (Cin, Cout, 2, 2) -> (4*Cout, Cin), row index r = (2*ki + kj)*Cout + co.
    w_t = jnp.transpose(weight, (2, 3, 1, 0)).reshape(4 * Cout, Cin)
    w_t = w_t.astype(jnp.bfloat16)
    b_col = bias.astype(jnp.float32).reshape(Cout, 1)

    # output_down in the same flattened view (free reshape); copied through the
    # kernel so the channel concat costs no extra HBM pass.
    down_f = output_down.reshape(N, Cdown, Q)

    # --- tile / VMEM sizing ---------------------------------------------------
    itemsize_down = down_f.dtype.itemsize
    itemsize_out = jnp.dtype(out_dtype).itemsize
    per_col = (2 * (2 * Cin + itemsize_down * Cdown + itemsize_out * Ctot)
               + 4 * 4 * Cout)                      # dbl-buffered blocks + f32 matmul temp
    vmem_limit = _vmem_limit_bytes()
    weight_bytes = 2 * (w_t.size * 2 + Cout * 4)    # resident weights + bias (dbl-buffered)
    budget = max(vmem_limit - weight_bytes - 6 * 1024 * 1024, 1 * 1024 * 1024)
    TM = _pick_tm(H, W, per_col, budget)
    grid = (N, Q // TM)

    def kernel(xq_ref, down_ref, w_ref, b_ref, o_ref):
        # Single MXU matmul with all 4 deconv taps fused into the row dim.
        r = jnp.dot(w_ref[...], xq_ref[...],
                    preferred_element_type=jnp.float32)               # (4*Cout, TM)
        # Global output-column index of every lane in this tile.
        q = lax.broadcasted_iota(jnp.int32, (1, TM), 1) + pl.program_id(1) * TM
        kj_odd = (q % 2) == 1                      # column parity -> tap kj
        ki_odd = (q % (4 * W)) >= (2 * W)          # row parity    -> tap ki
        top = jnp.where(kj_odd, r[Cout:2 * Cout, :], r[0:Cout, :])                 # ki = 0
        bot = jnp.where(kj_odd, r[3 * Cout:4 * Cout, :], r[2 * Cout:3 * Cout, :])  # ki = 1
        y = jnp.where(ki_odd, bot, top) + b_ref[...]
        # Fused channel concat: output_down flows through to channels [0, Cdown).
        o_ref[0:Cdown, :] = down_ref[...].astype(o_ref.dtype)
        o_ref[Cdown:Cdown + Cout, :] = y.astype(o_ref.dtype)

    flops = 2 * 4 * Cout * Cin * N * Q
    bytes_accessed = (2 * N * Cin * Q
                      + itemsize_down * N * Cdown * Q
                      + itemsize_out * N * Ctot * Q
                      + 2 * 4 * Cout * Cin + 4 * Cout)

    out = pl.pallas_call(
        kernel,
        out_shape=jax.ShapeDtypeStruct((N, Ctot, Q), out_dtype),
        grid=grid,
        in_specs=[
            pl.BlockSpec((None, Cin, TM), lambda n, t: (n, 0, t)),     # xq tile
            pl.BlockSpec((None, Cdown, TM), lambda n, t: (n, 0, t)),   # skip-connection tile
            pl.BlockSpec((4 * Cout, Cin), lambda n, t: (0, 0)),        # weights (resident)
            pl.BlockSpec((Cout, 1), lambda n, t: (0, 0)),              # bias (resident)
        ],
        out_specs=pl.BlockSpec((None, Ctot, TM), lambda n, t: (n, 0, t)),
        compiler_params=pltpu.CompilerParams(
            dimension_semantics=("parallel", "parallel"),
            vmem_limit_bytes=vmem_limit,
        ),
        cost_estimate=pl.CostEstimate(
            flops=flops, transcendentals=0, bytes_accessed=bytes_accessed),
    )(xq, down_f, w_t, b_col)

    # Free (contiguous) reshape back to NCHW -- no HBM round trip.
    return out.reshape(N, Ctot, 2 * H, 2 * W)


if __name__ == "__main__":
    key = jax.random.PRNGKey(0)
    k1, k2, k3, k4 = jax.random.split(key, 4)

    N, Cin, Cout, H, W = 2, 4, 8, 16, 16
    x = jax.random.normal(k1, (N, Cin, H, W), jnp.float32)
    output_down = jax.random.normal(k2, (N, Cout, 2 * H, 2 * W), jnp.float32)

    # Deterministic synthetic parameters (ConvTranspose2d(in=4, out=8, k=2)).
    weight = jax.random.normal(k3, (Cin, Cout, 2, 2), jnp.float32) * 0.1
    bias = jax.random.normal(k4, (Cout,), jnp.float32) * 0.1

    fwd = jax.jit(upconv_forward)
    out = jax.block_until_ready(fwd(x, output_down, weight, bias))
    assert out.shape == (N, 2 * Cout, 2 * H, 2 * W), out.shape

    # NumPy reference: ConvTranspose2d(kernel=2, stride=2) + channel concat.
    # Inputs rounded to bf16 exactly like the kernel; accumulation stays f32.
    xn = np.asarray(x.astype(jnp.bfloat16).astype(jnp.float32))
    wn = np.asarray(weight.astype(jnp.bfloat16).astype(jnp.float32))
    bn = np.asarray(bias)
    dn = np.asarray(output_down)
    ref = np.zeros((N, Cout, 2 * H, 2 * W), np.float32) + bn[None, :, None, None]
    for ki in range(2):
        for kj in range(2):
            ref[:, :, ki::2, kj::2] += np.einsum(
                "nchw,cd->ndhw", xn, wn[:, :, ki, kj])
    ref = np.concatenate([dn, ref], axis=1)
    np.testing.assert_allclose(np.asarray(out), ref, rtol=1e-3, atol=1e-3)

    print("KERNEL_OK")
</pallas_src>

<mosaic_0001>
module attributes {stable_mosaic.version = 11 : i64} {
  func.func @kernel(%arg0: i32, %arg1: i32, %arg2: memref<1x4x1024xbf16, #tpu.memory_space<vmem>>, %arg3: memref<1x8x1024xf32, #tpu.memory_space<vmem>>, %arg4: memref<32x4xbf16, #tpu.memory_space<vmem>>, %arg5: memref<8x1xf32, #tpu.memory_space<vmem>>, %arg6: memref<1x16x1024xf32, #tpu.memory_space<vmem>>) attributes {dimension_semantics = [#tpu.dimension_semantics<parallel>, #tpu.dimension_semantics<parallel>], iteration_bounds = array<i64: 2, 1>, scalar_prefetch = 0 : i64, scratch_operands = 0 : i64, tpu.core_type = #tpu.core_type<tc>, window_params = [{transform_indices = @transform_0, window_bounds = array<i64: 1, 4, 1024>}, {transform_indices = @transform_1, window_bounds = array<i64: 1, 8, 1024>}, {pipeline_mode = #tpu.pipeline_mode<synchronous>, transform_indices = @transform_2, window_bounds = array<i64: 32, 4>}, {pipeline_mode = #tpu.pipeline_mode<synchronous>, transform_indices = @transform_3, window_bounds = array<i64: 8, 1>}, {transform_indices = @transform_4, window_bounds = array<i64: 1, 16, 1024>}]} {
    %c0 = arith.constant 0 : index
    %c0_0 = arith.constant 0 : index
    %0 = vector.load %arg4[%c0, %c0_0] : memref<32x4xbf16, #tpu.memory_space<vmem>>, vector<32x4xbf16>
    %c0_1 = arith.constant 0 : index
    %c0_2 = arith.constant 0 : index
    %c0_3 = arith.constant 0 : index
    %1 = vector.load %arg2[%c0_1, %c0_2, %c0_3] : memref<1x4x1024xbf16, #tpu.memory_space<vmem>>, vector<1x4x1024xbf16>
    %2 = vector.shape_cast %1 : vector<1x4x1024xbf16> to vector<4x1024xbf16>
    %cst = arith.constant dense<0.000000e+00> : vector<32x1024xf32>
    %3 = tpu.matmul %0, %2, %cst {dimension_numbers = #tpu.dot_dimension_numbers<[1], [0], [0], [1], [0, 0, 1, 1], [], []>} : vector<32x4xbf16>, vector<4x1024xbf16>, vector<32x1024xf32> -> vector<32x1024xf32>
    %4 = tpu.iota {dimensions = array<i32: 1>} : vector<1x1024xi32>
    %c1024_i32 = arith.constant 1024 : i32
    %5 = arith.muli %arg1, %c1024_i32 : i32
    %6 = vector.broadcast %5 : i32 to vector<1x1024xi32>
    %7 = arith.addi %4, %6 : vector<1x1024xi32>
    %c2_i32 = arith.constant 2 : i32
    %c0_i32 = arith.constant 0 : i32
    %8 = arith.cmpi eq, %c2_i32, %c0_i32 : i32
    %c1_i32 = arith.constant 1 : i32
    %9 = arith.select %8, %c1_i32, %c2_i32 : i32
    %10 = vector.broadcast %9 : i32 to vector<1x1024xi32>
    %11 = arith.remsi %7, %10 : vector<1x1024xi32>
    %c0_i32_4 = arith.constant 0 : i32
    %12 = vector.broadcast %c0_i32_4 : i32 to vector<1x1024xi32>
    %13 = arith.cmpi ne, %11, %12 : vector<1x1024xi32>
    %c0_i32_5 = arith.constant 0 : i32
    %14 = vector.broadcast %c0_i32_5 : i32 to vector<1x1024xi32>
    %15 = arith.cmpi slt, %11, %14 : vector<1x1024xi32>
    %c0_i32_6 = arith.constant 0 : i32
    %16 = arith.cmpi slt, %9, %c0_i32_6 : i32
    %17 = vector.broadcast %16 : i1 to vector<1x1024xi1>
    %18 = vector.broadcast %17 : vector<1x1024xi1> to vector<1x1024xi1>
    %19 = arith.xori %15, %18 : vector<1x1024xi1>
    %20 = arith.andi %19, %13 : vector<1x1024xi1>
    %21 = vector.broadcast %9 : i32 to vector<1x1024xi32>
    %22 = arith.addi %11, %21 : vector<1x1024xi32>
    %23 = arith.select %20, %22, %11 : vector<1x1024xi1>, vector<1x1024xi32>
    %c1_i32_7 = arith.constant 1 : i32
    %24 = vector.broadcast %c1_i32_7 : i32 to vector<1x1024xi32>
    %25 = arith.cmpi eq, %23, %24 : vector<1x1024xi32>
    %c64_i32 = arith.constant 64 : i32
    %c0_i32_8 = arith.constant 0 : i32
    %26 = arith.cmpi eq, %c64_i32, %c0_i32_8 : i32
    %c1_i32_9 = arith.constant 1 : i32
    %27 = arith.select %26, %c1_i32_9, %c64_i32 : i32
    %28 = vector.broadcast %27 : i32 to vector<1x1024xi32>
    %29 = arith.remsi %7, %28 : vector<1x1024xi32>
    %c0_i32_10 = arith.constant 0 : i32
    %30 = vector.broadcast %c0_i32_10 : i32 to vector<1x1024xi32>
    %31 = arith.cmpi ne, %29, %30 : vector<1x1024xi32>
    %c0_i32_11 = arith.constant 0 : i32
    %32 = vector.broadcast %c0_i32_11 : i32 to vector<1x1024xi32>
    %33 = arith.cmpi slt, %29, %32 : vector<1x1024xi32>
    %c0_i32_12 = arith.constant 0 : i32
    %34 = arith.cmpi slt, %27, %c0_i32_12 : i32
    %35 = vector.broadcast %34 : i1 to vector<1x1024xi1>
    %36 = vector.broadcast %35 : vector<1x1024xi1> to vector<1x1024xi1>
    %37 = arith.xori %33, %36 : vector<1x1024xi1>
    %38 = arith.andi %37, %31 : vector<1x1024xi1>
    %39 = vector.broadcast %27 : i32 to vector<1x1024xi32>
    %40 = arith.addi %29, %39 : vector<1x1024xi32>
    %41 = arith.select %38, %40, %29 : vector<1x1024xi1>, vector<1x1024xi32>
    %c32_i32 = arith.constant 32 : i32
    %42 = vector.broadcast %c32_i32 : i32 to vector<1x1024xi32>
    %43 = arith.cmpi sge, %41, %42 : vector<1x1024xi32>
    %44 = vector.extract_strided_slice %3 {offsets = [8, 0], sizes = [8, 1024], strides = [1, 1]} : vector<32x1024xf32> to vector<8x1024xf32>
    %45 = vector.extract_strided_slice %3 {offsets = [0, 0], sizes = [8, 1024], strides = [1, 1]} : vector<32x1024xf32> to vector<8x1024xf32>
    %46 = vector.shape_cast %25 : vector<1x1024xi1> to vector<1x1024xi1>
    %47 = vector.broadcast %46 : vector<1x1024xi1> to vector<8x1024xi1>
    %48 = arith.select %47, %44, %45 : vector<8x1024xi1>, vector<8x1024xf32>
    %49 = vector.extract_strided_slice %3 {offsets = [24, 0], sizes = [8, 1024], strides = [1, 1]} : vector<32x1024xf32> to vector<8x1024xf32>
    %50 = vector.extract_strided_slice %3 {offsets = [16, 0], sizes = [8, 1024], strides = [1, 1]} : vector<32x1024xf32> to vector<8x1024xf32>
    %51 = vector.shape_cast %25 : vector<1x1024xi1> to vector<1x1024xi1>
    %52 = vector.broadcast %51 : vector<1x1024xi1> to vector<8x1024xi1>
    %53 = arith.select %52, %49, %50 : vector<8x1024xi1>, vector<8x1024xf32>
    %54 = vector.shape_cast %43 : vector<1x1024xi1> to vector<1x1024xi1>
    %55 = vector.broadcast %54 : vector<1x1024xi1> to vector<8x1024xi1>
    %56 = arith.select %55, %53, %48 : vector<8x1024xi1>, vector<8x1024xf32>
    %c0_13 = arith.constant 0 : index
    %c0_14 = arith.constant 0 : index
    %57 = vector.load %arg5[%c0_13, %c0_14] : memref<8x1xf32, #tpu.memory_space<vmem>>, vector<8x1xf32>
    %58 = vector.broadcast %57 : vector<8x1xf32> to vector<8x1024xf32>
    %59 = arith.addf %56, %58 : vector<8x1024xf32>
    %c0_15 = arith.constant 0 : index
    %c0_16 = arith.constant 0 : index
    %c0_17 = arith.constant 0 : index
    %60 = vector.load %arg3[%c0_15, %c0_16, %c0_17] : memref<1x8x1024xf32, #tpu.memory_space<vmem>>, vector<1x8x1024xf32>
    %61 = vector.shape_cast %60 : vector<1x8x1024xf32> to vector<8x1024xf32>
    %c0_18 = arith.constant 0 : index
    %c0_19 = arith.constant 0 : index
    %c0_20 = arith.constant 0 : index
    %62 = vector.load %arg6[%c0_18, %c0_19, %c0_20] : memref<1x16x1024xf32, #tpu.memory_space<vmem>>, vector<1x8x1024xf32>
    %63 = vector.shape_cast %62 : vector<1x8x1024xf32> to vector<8x1024xf32>
    %64 = vector.shape_cast %61 : vector<8x1024xf32> to vector<1x8x1024xf32>
    tpu.vector_store %arg6[%c0_18, %c0_19, %c0_20], %64 {strides = array<i32>} : memref<1x16x1024xf32, #tpu.memory_space<vmem>>, vector<1x8x1024xf32>,
    %c0_21 = arith.constant 0 : index
    %c8 = arith.constant 8 : index
    %c0_22 = arith.constant 0 : index
    %65 = vector.load %arg6[%c0_21, %c8, %c0_22] : memref<1x16x1024xf32, #tpu.memory_space<vmem>>, vector<1x8x1024xf32>
    %66 = vector.shape_cast %65 : vector<1x8x1024xf32> to vector<8x1024xf32>
    %67 = vector.shape_cast %59 : vector<8x1024xf32> to vector<1x8x1024xf32>
    tpu.vector_store %arg6[%c0_21, %c8, %c0_22], %67 {strides = array<i32>} : memref<1x16x1024xf32, #tpu.memory_space<vmem>>, vector<1x8x1024xf32>,
    return
  }
  func.func @transform_0(%arg0: i32, %arg1: i32) -> (i32, i32, i32) {
    %c0_i32 = arith.constant 0 : i32
    %c0_i32_0 = arith.constant 0 : i32
    return %arg0, %c0_i32, %arg1 : i32, i32, i32
  }
  func.func @transform_1(%arg0: i32, %arg1: i32) -> (i32, i32, i32) {
    %c0_i32 = arith.constant 0 : i32
    %c0_i32_0 = arith.constant 0 : i32
    return %arg0, %c0_i32, %arg1 : i32, i32, i32
  }
  func.func @transform_2(%arg0: i32, %arg1: i32) -> (i32, i32) {
    %c0_i32 = arith.constant 0 : i32
    %c0_i32_0 = arith.constant 0 : i32
    %c0_i32_1 = arith.constant 0 : i32
    return %c0_i32, %c0_i32_0 : i32, i32
  }
  func.func @transform_3(%arg0: i32, %arg1: i32) -> (i32, i32) {
    %c0_i32 = arith.constant 0 : i32
    %c0_i32_0 = arith.constant 0 : i32
    %c0_i32_1 = arith.constant 0 : i32
    return %c0_i32, %c0_i32_0 : i32, i32
  }
  func.func @transform_4(%arg0: i32, %arg1: i32) -> (i32, i32, i32) {
    %c0_i32 = arith.constant 0 : i32
    %c0_i32_0 = arith.constant 0 : i32
    return %arg0, %c0_i32, %arg1 : i32, i32, i32
  }
}

</mosaic_0001>

<llo_original>
// kernel: upconv_forward.1
$region0: #{upconv_forward.1}
  #allocation0 [shape = 'u32[]', space=smem, size = 0x4, offset = 0x4, fixed_abs, tag = 'smem constant byte address 0x4 - core index']
  #allocation1 [shape = 'u32[72,128]{1,0:T(1,128)}', space=vmem, size = 0x9000, scoped, tag = 'internal scratch']
  %s0 = inlined_call_operand.vmem [shape: bf16[2,4,1024], index: 0, kind: input, shape index: {}]
  %s1 = inlined_call_operand.vmem [shape: f32[2,8,1024], index: 1, kind: input, shape index: {}]
  %s2 = inlined_call_operand.vmem [shape: bf16[32,4], index: 2, kind: input, shape index: {}]
  %s3 = inlined_call_operand.vmem [shape: f32[8,1], index: 3, kind: input, shape index: {}]
  %s4 = inlined_call_operand.vmem [shape: f32[2,16,1024], index: 4, kind: output, shape index: {}]
  %s5 = sld [smem:[#allocation0]]
  $region49: #{upconv_forward.1} parent=0
    _
  %s7 = ssub.s32 1, %s5
  %s8 = scalar_select 0, %s7, %s5
  loop: start=0, step=1, limit=4
  $region2: #{upconv_forward.1} parent=0 // loop_pre_header
    _
  $region3: #{upconv_forward.1} parent=0 // loop_header
    %s10 = sphi 0, %s14
    %p11 = scmp.ge.s32.totalorder %s10, 4
    %s17 = sphi 0, %s29
    %s18 = sphi 0, %s25
    %s19 = sphi 0, %s17
    %s20 = sphi 0, %s18
    %s21 = sphi 0, %s19
    %s22 = sphi 0, %s20
    %s34 = sphi 0, %s36
    %s37 = sphi 0, %s34
    %s38 = sphi 0, %s37
    %s54 = sphi 0, %s38
    %s62 = sphi 0, %s64
    %s65 = sphi 0, %s62
    %s66 = sphi 0, %s65
    %s82 = sphi 0, %s66
    %s86 = sphi 0, %s86
    %s88 = sphi 0, %s86
    %s89 = sphi 0, %s88
    %s103 = sphi 0, %s89
    %s107 = sphi 0, %s107
    %s109 = sphi 0, %s107
    %s110 = sphi 0, %s109
    %s124 = sphi 0, %s110
    %s132 = sphi 0, %s134
    %s135 = sphi 0, %s132
    %s136 = sphi 0, %s135
    %s152 = sphi 0, %s136
  $region4: #{upconv_forward.1} parent=0 // loop_header_branch
    %13 = sbr.rel (%p11) target = $region8
  $region5: #{upconv_forward.1} parent=0 // loop_body
    %s15 = ssub.s32 %s10, 1
    %s16 = ssub.s32 %s10, 2
    %s23 = sadd.s32 1, %s18
    %p24 = scmp.ge.s32.totalorder %s23, 1
    %s25 = scalar_select %p24, 0, %s23
    %s26 = sadd.s32 1, %s17
    %s27 = scalar_select %p24, %s26, %s17
    %p28 = scmp.ge.s32.totalorder %s27, 2
    %s29 = scalar_select %p28, 0, %s27
    %s30 = ssub.s32 %s17, %s29
    %s31 = ssub.s32 %s18, %s25
    %s32 = sor.u32 %s30, %s31
    %p33 = scmp.eq.s32.totalorder %s32, 0
    %s35 = sadd.s32 %s34, 1
    %s36 = scalar_select %p33, %s34, %s35
    %p39 = pneg %p33
    %p40 = scmp.eq.s32.totalorder %s10, 1
    %p41 = por %p39, %p40
    %p42 = scmp.ne.s32.totalorder %s34, %s37
    %p43 = scmp.eq.s32.totalorder %s10, 0
    %p44 = por %p42, %p43
    %p45 = scmp.ne.s32.totalorder %s34, %s37
    %p46 = scmp.eq.s32.totalorder %s15, 1
    %p47 = por %p45, %p46
    %p48 = scmp.ne.s32.totalorder %s37, %s38
    %p49 = scmp.eq.s32.totalorder %s15, 0
    %p50 = por %p48, %p49
    %p51 = scmp.ne.s32.totalorder %s37, %s38
    %p52 = scmp.eq.s32.totalorder %s16, 1
    %p53 = por %p51, %p52
    %p55 = scmp.ne.s32.totalorder %s38, %s54
    %p56 = scmp.eq.s32.totalorder %s16, 0
    %p57 = por %p55, %p56
    %s58 = ssub.s32 %s17, %s29
    %s59 = ssub.s32 %s18, %s25
    %s60 = sor.u32 %s58, %s59
    %p61 = scmp.eq.s32.totalorder %s60, 0
    %s63 = sadd.s32 %s62, 1
    %s64 = scalar_select %p61, %s62, %s63
    %p67 = pneg %p61
    %p68 = scmp.eq.s32.totalorder %s10, 1
    %p69 = por %p67, %p68
    %p70 = scmp.ne.s32.totalorder %s62, %s65
    %p71 = scmp.eq.s32.totalorder %s10, 0
    %p72 = por %p70, %p71
    %p73 = scmp.ne.s32.totalorder %s62, %s65
    %p74 = scmp.eq.s32.totalorder %s15, 1
    %p75 = por %p73, %p74
    %p76 = scmp.ne.s32.totalorder %s65, %s66
    %p77 = scmp.eq.s32.totalorder %s15, 0
    %p78 = por %p76, %p77
    %p79 = scmp.ne.s32.totalorder %s65, %s66
    %p80 = scmp.eq.s32.totalorder %s16, 1
    %p81 = por %p79, %p80
    %p83 = scmp.ne.s32.totalorder %s66, %s82
    %p84 = scmp.eq.s32.totalorder %s16, 0
    %p85 = por %p83, %p84
    %s87 = sadd.s32 %s86, 1
    %p90 = scmp.eq.s32.totalorder %s10, 1
    %p91 = scmp.ne.s32.totalorder %s86, %s88
    %p92 = scmp.eq.s32.totalorder %s10, 0
    %p93 = por %p91, %p92
    %p94 = scmp.ne.s32.totalorder %s86, %s88
    %p95 = scmp.eq.s32.totalorder %s15, 1
    %p96 = por %p94, %p95
    %p97 = scmp.ne.s32.totalorder %s88, %s89
    %p98 = scmp.eq.s32.totalorder %s15, 0
    %p99 = por %p97, %p98
    %p100 = scmp.ne.s32.totalorder %s88, %s89
    %p101 = scmp.eq.s32.totalorder %s16, 1
    %p102 = por %p100, %p101
    %p104 = scmp.ne.s32.totalorder %s89, %s103
    %p105 = scmp.eq.s32.totalorder %s16, 0
    %p106 = por %p104, %p105
    %s108 = sadd.s32 %s107, 1
    %p111 = scmp.eq.s32.totalorder %s10, 1
    %p112 = scmp.ne.s32.totalorder %s107, %s109
    %p113 = scmp.eq.s32.totalorder %s10, 0
    %p114 = por %p112, %p113
    %p115 = scmp.ne.s32.totalorder %s107, %s109
    %p116 = scmp.eq.s32.totalorder %s15, 1
    %p117 = por %p115, %p116
    %p118 = scmp.ne.s32.totalorder %s109, %s110
    %p119 = scmp.eq.s32.totalorder %s15, 0
    %p120 = por %p118, %p119
    %p121 = scmp.ne.s32.totalorder %s109, %s110
    %p122 = scmp.eq.s32.totalorder %s16, 1
    %p123 = por %p121, %p122
    %p125 = scmp.ne.s32.totalorder %s110, %s124
    %p126 = scmp.eq.s32.totalorder %s16, 0
    %p127 = por %p125, %p126
    %s128 = ssub.s32 %s17, %s29
    %s129 = ssub.s32 %s18, %s25
    %s130 = sor.u32 %s128, %s129
    %p131 = scmp.eq.s32.totalorder %s130, 0
    %s133 = sadd.s32 %s132, 1
    %s134 = scalar_select %p131, %s132, %s133
    %p137 = pneg %p131
    %p138 = scmp.eq.s32.totalorder %s10, 1
    %p139 = por %p137, %p138
    %p140 = scmp.ne.s32.totalorder %s132, %s135
    %p141 = scmp.eq.s32.totalorder %s10, 0
    %p142 = por %p140, %p141
    %p143 = scmp.ne.s32.totalorder %s132, %s135
    %p144 = scmp.eq.s32.totalorder %s15, 1
    %p145 = por %p143, %p144
    %p146 = scmp.ne.s32.totalorder %s135, %s136
    %p147 = scmp.eq.s32.totalorder %s15, 0
    %p148 = por %p146, %p147
    %p149 = scmp.ne.s32.totalorder %s135, %s136
    %p150 = scmp.eq.s32.totalorder %s16, 1
    %p151 = por %p149, %p150
    %p153 = scmp.ne.s32.totalorder %s136, %s152
    %p154 = scmp.eq.s32.totalorder %s16, 0
    %p155 = por %p153, %p154
    %p156 = scmp.le.s32.totalorder 1, %s10
    %p157 = scmp.lt.s32.totalorder %s10, 3
    %p158 = pnand %p156, %p157
    %p159 = pneg %p158
    // Predicated region
    $region9: #{upconv_forward.1} parent=5 // pred_check
      _
    $region10: #{upconv_forward.1} parent=5 // pred_check_branch
      %161 = sbr.rel (%p158) target = $region12
    $region11: #{upconv_forward.1} parent=5 // pred_region
      %s162 = ssub.s32 %s10, 1
      // Predicated region
      $region13: #{upconv_forward.1} parent=11 // pred_check
        %p163 = pneg %p99
      $region14: #{upconv_forward.1} parent=11 // pred_check_branch
        %165 = sbr.rel (%p163) target = $region16
      $region15: #{upconv_forward.1} parent=11 // pred_region
        _
      $region16: #{upconv_forward.1} parent=11 // pred_fallthru
        _
      // Predicated region
      $region17: #{upconv_forward.1} parent=11 // pred_check
        %p166 = pneg %p120
      $region18: #{upconv_forward.1} parent=11 // pred_check_branch
        %168 = sbr.rel (%p166) target = $region20
      $region19: #{upconv_forward.1} parent=11 // pred_region
        _
      $region20: #{upconv_forward.1} parent=11 // pred_fallthru
        _
    $region12: #{upconv_forward.1} parent=5 // pred_fallthru
      _
    %p169 = scmp.lt.s32.totalorder %s10, 2
    // Predicated region
    $region21: #{upconv_forward.1} parent=5 // pred_check
      %p170 = pneg %p169
    $region22: #{upconv_forward.1} parent=5 // pred_check_branch
      %172 = sbr.rel (%p170) target = $region24
    $region23: #{upconv_forward.1} parent=5 // pred_region
      // Predicated region
      $region25: #{upconv_forward.1} parent=23 // pred_check
        %p173 = pneg %p44
      $region26: #{upconv_forward.1} parent=23 // pred_check_branch
        %175 = sbr.rel (%p173) target = $region28
      $region27: #{upconv_forward.1} parent=23 // pred_region
        %s176 = smul.u32 8, %s18
        %p177 = scmp.lt.s32.totalorder %s17, 1
        %s178 = scalar_select %p177, %s17, 1
        %p179 = scmp.lt.s32.totalorder %s176, 7
        %s180 = scalar_select %p179, %s176, 7
        %s181 = smul.addr %s178, 8
        %s182 = sadd.s32 %s180, %s181
        %s183 = smul.addr %s182, 2
        %s184 = scalar_lea.vmem %s0, %s183
        %s185 = smul.u32 8, %s18
      $region28: #{upconv_forward.1} parent=23 // pred_fallthru
        _
      // Predicated region
      $region29: #{upconv_forward.1} parent=23 // pred_check
        %p186 = pneg %p72
      $region30: #{upconv_forward.1} parent=23 // pred_check_branch
        %188 = sbr.rel (%p186) target = $region32
      $region31: #{upconv_forward.1} parent=23 // pred_region
        %s189 = smul.u32 8, %s18
        %p190 = scmp.lt.s32.totalorder %s17, 1
        %s191 = scalar_select %p190, %s17, 1
        %p192 = scmp.lt.s32.totalorder %s189, 7
        %s193 = scalar_select %p192, %s189, 7
        %s194 = smul.addr %s191, 8
        %s195 = sadd.s32 %s193, %s194
        %s196 = smul.addr %s195, 8
        %s197 = scalar_lea.vmem %s1, %s196
        %s198 = smul.u32 8, %s18
      $region32: #{upconv_forward.1} parent=23 // pred_fallthru
        _
    $region24: #{upconv_forward.1} parent=5 // pred_fallthru
      _
    %p199 = scmp.le.s32.totalorder 1, %s10
    %p200 = scmp.lt.s32.totalorder %s10, 3
    %p201 = pnand %p199, %p200
    %p202 = pneg %p201
    // Predicated region
    $region33: #{upconv_forward.1} parent=5 // pred_check
      _
    $region34: #{upconv_forward.1} parent=5 // pred_check_branch
      %204 = sbr.rel (%p201) target = $region36
    $region35: #{upconv_forward.1} parent=5 // pred_region
      %s205 = ssub.s32 %s10, 1
      %s206 = smul.u32 8, %s20
      %p207 = scmp.lt.s32.totalorder %s19, 1
      %s208 = scalar_select %p207, %s19, 1
      %p209 = scmp.lt.s32.totalorder %s206, 7
      %s210 = scalar_select %p209, %s206, 7
      %s211 = smul.addr %s208, 8
      %s212 = sadd.s32 %s210, %s211
      %s213 = smul.addr %s212, 2
      %s214 = scalar_lea.vmem %s0, %s213
      %p215 = pneg %p50
      %p216 = pneg %p47
      %s217 = smul.u32 8, %s20
      %p218 = scmp.lt.s32.totalorder %s19, 1
      %s219 = scalar_select %p218, %s19, 1
      %p220 = scmp.lt.s32.totalorder %s217, 7
      %s221 = scalar_select %p220, %s217, 7
      %s222 = smul.addr %s219, 8
      %s223 = sadd.s32 %s221, %s222
      %s224 = smul.addr %s223, 8
      %s225 = scalar_lea.vmem %s1, %s224
      %p226 = pneg %p78
      %p227 = pneg %p75
      %p228 = pneg %p99
      %p229 = pneg %p96
      %p230 = pneg %p120
      %p231 = pneg %p117
      %p232 = pneg %p148
      %p233 = pneg %p145
      %s234 = smul.u32 8, %s20
      %p235 = scmp.lt.s32.totalorder %s19, 1
      %s236 = scalar_select %p235, %s19, 1
      %p237 = scmp.lt.s32.totalorder %s234, 7
      %s238 = scalar_select %p237, %s234, 7
      %s239 = smul.addr %s236, 16
      %s240 = sadd.s32 %s238, %s239
      %s241 = smul.addr %s240, 8
      %s242 = scalar_lea.vmem %s4, %s241
      %s243 = smul.u32 8, %s20
      %p244 = scmp.lt.s32.totalorder %s19, 1
      %s245 = scalar_select %p244, %s19, 1
      %p246 = scmp.lt.s32.totalorder %s243, 7
      %s247 = scalar_select %p246, %s243, 7
      %s248 = smul.addr %s245, 8
      %s249 = sadd.s32 %s247, %s248
      %s250 = smul.addr %s249, 2
      %s251 = scalar_lea.vmem %s0, %s250
      %s252 = smul.u32 8, %s20
      %s253 = smul.u32 8, %s20
      %p254 = scmp.lt.s32.totalorder %s19, 1
      %s255 = scalar_select %p254, %s19, 1
      %p256 = scmp.lt.s32.totalorder %s253, 7
      %s257 = scalar_select %p256, %s253, 7
      %s258 = smul.addr %s255, 8
      %s259 = sadd.s32 %s257, %s258
      %s260 = smul.addr %s259, 8
      %s261 = scalar_lea.vmem %s1, %s260
      %s262 = smul.u32 8, %s20
      %s263 = smul.u32 8, %s20
      %p264 = scmp.lt.s32.totalorder %s19, 1
      %s265 = scalar_select %p264, %s19, 1
      %p266 = scmp.lt.s32.totalorder %s263, 7
      %s267 = scalar_select %p266, %s263, 7
      %s268 = smul.addr %s265, 16
      %s269 = sadd.s32 %s267, %s268
      %s270 = smul.addr %s269, 8
      %s271 = scalar_lea.vmem %s4, %s270
      %s272 = smul.u32 8, %s20
      %v274 = vld [vmem:[%s2] sm:$0xf]
      %v275 = vld [vmem:[%s2 + $0x4] sm:$0xf]
      %v276 = vld [vmem:[%s2 + $0x8] sm:$0xf]
      %v277 = vld [vmem:[%s2 + $0xc] sm:$0xf]
      %v278 = vld [vmem:[%s251] sm:$0xff]
      %v279 = vld [vmem:[%s251 + $0x8] sm:$0xff]
      %v284 = vunpack.c.l.b16 %v274
      %v285 = vunpack.c.l.b16 %v275
      %v286 = vunpack.c.l.b16 %v276
      %v287 = vunpack.c.l.b16 %v277
      %v288 = vpack.c.b16 %v285, %v284
      %v289 = vpack.c.b16 %v287, %v286
      %291 = vst [vmem:[#allocation1] ss:$4 sm:$0xff] %v278
      %s293 = scalar_lea.vmem [#allocation1], 32
      %294 = vst [vmem:[%s293] ss:$4 sm:$0xff] %v279
      %v295 = vld.sshfl [vmem:[#allocation1] sm:$0xff pattern:$0x73625140]
      %v296 = vld.sshfl [vmem:[#allocation1 + $0x8] sm:$0xff pattern:$0x73625140]
      %v297 = vld.sshfl [vmem:[#allocation1 + $0x10] sm:$0xff pattern:$0x73625140]
      %v298 = vld.sshfl [vmem:[#allocation1 + $0x18] sm:$0xff pattern:$0x73625140]
      %v299 = vld.sshfl [vmem:[#allocation1 + $0x20] sm:$0xff pattern:$0x73625140]
      %v300 = vld.sshfl [vmem:[#allocation1 + $0x28] sm:$0xff pattern:$0x73625140]
      %v301 = vld.sshfl [vmem:[#allocation1 + $0x30] sm:$0xff pattern:$0x73625140]
      %v302 = vld.sshfl [vmem:[#allocation1 + $0x38] sm:$0xff pattern:$0x73625140]
      %vm303 = vcmask 31744
      %v305 = vsel %vm303, %v288, 0
      %v308 = vsel %vm303, %v289, 0
      %vm310 = vcmask 1041408
      %v311 = vsel %vm310, %v295, 0
      %v313 = vsel %vm310, %v296, 0
      %v315 = vsel %vm310, %v297, 0
      %v317 = vsel %vm310, %v298, 0
      %v319 = vsel %vm310, %v299, 0
      %v321 = vsel %vm310, %v300, 0
      %v323 = vsel %vm310, %v301, 0
      %v325 = vsel %vm310, %v302, 0
      %327 = vmatpush.bf16.msra.mxu0 0
      %328 = vmatpush.bf16.msra.mxu0 0
      %329 = vmatpush.bf16.msra.mxu0 0
      %330 = vmatpush.bf16.msra.mxu0 0
      %331 = vmatpush.bf16.msra.mxu0 0
      %332 = vmatpush.bf16.msra.mxu0 0
      %333 = vmatpush.bf16.msra.mxu0 0
      %334 = vmatpush.bf16.msra.mxu0 %v311
      %335 = vmatmul.bf16.gmra.mxu0 %v305
      %v336 = vpop.f32.mrf.mxu0
      %v337 = vadd.f32 0.0, %v336
      %v338 = vpop.f32.mrf.mxu0
      %v339 = vadd.f32 0.0, %v338
      %340 = vmatmul.bf16.gmra.mxu0 %v308
      %v341 = vpop.f32.mrf.mxu0
      %v342 = vadd.f32 0.0, %v341
      %v343 = vpop.f32.mrf.mxu0
      %v344 = vadd.f32 0.0, %v343
      %345 = vdwg.mxu0
      %346 = vmatpush.bf16.msra.mxu0 0
      %347 = vmatpush.bf16.msra.mxu0 0
      %348 = vmatpush.bf16.msra.mxu0 0
      %349 = vmatpush.bf16.msra.mxu0 0
      %350 = vmatpush.bf16.msra.mxu0 0
      %351 = vmatpush.bf16.msra.mxu0 0
      %352 = vmatpush.bf16.msra.mxu0 0
      %353 = vmatpush.bf16.msra.mxu0 %v313
      %354 = vmatmul.bf16.gmra.mxu0 %v305
      %v355 = vpop.f32.mrf.mxu0
      %v356 = vadd.f32 0.0, %v355
      %v357 = vpop.f32.mrf.mxu0
      %v358 = vadd.f32 0.0, %v357
      %359 = vmatmul.bf16.gmra.mxu0 %v308
      %v360 = vpop.f32.mrf.mxu0
      %v361 = vadd.f32 0.0, %v360
      %v362 = vpop.f32.mrf.mxu0
      %v363 = vadd.f32 0.0, %v362
      %364 = vdwg.mxu0
      %365 = vmatpush.bf16.msra.mxu0 0
      %366 = vmatpush.bf16.msra.mxu0 0
      %367 = vmatpush.bf16.msra.mxu0 0
      %368 = vmatpush.bf16.msra.mxu0 0
      %369 = vmatpush.bf16.msra.mxu0 0
      %370 = vmatpush.bf16.msra.mxu0 0
      %371 = vmatpush.bf16.msra.mxu0 0
      %372 = vmatpush.bf16.msra.mxu0 %v315
      %373 = vmatmul.bf16.gmra.mxu0 %v305
      %v374 = vpop.f32.mrf.mxu0
      %v375 = vadd.f32 0.0, %v374
      %v376 = vpop.f32.mrf.mxu0
      %v377 = vadd.f32 0.0, %v376
      %378 = vmatmul.bf16.gmra.mxu0 %v308
      %v379 = vpop.f32.mrf.mxu0
      %v380 = vadd.f32 0.0, %v379
      %v381 = vpop.f32.mrf.mxu0
      %v382 = vadd.f32 0.0, %v381
      %383 = vdwg.mxu0
      %384 = vmatpush.bf16.msra.mxu0 0
      %385 = vmatpush.bf16.msra.mxu0 0
      %386 = vmatpush.bf16.msra.mxu0 0
      %387 = vmatpush.bf16.msra.mxu0 0
      %388 = vmatpush.bf16.msra.mxu0 0
      %389 = vmatpush.bf16.msra.mxu0 0
      %390 = vmatpush.bf16.msra.mxu0 0
      %391 = vmatpush.bf16.msra.mxu0 %v317
      %392 = vmatmul.bf16.gmra.mxu0 %v305
      %v393 = vpop.f32.mrf.mxu0
      %v394 = vadd.f32 0.0, %v393
      %v395 = vpop.f32.mrf.mxu0
      %v396 = vadd.f32 0.0, %v395
      %397 = vmatmul.bf16.gmra.mxu0 %v308
      %v398 = vpop.f32.mrf.mxu0
      %v399 = vadd.f32 0.0, %v398
      %v400 = vpop.f32.mrf.mxu0
      %v401 = vadd.f32 0.0, %v400
      %402 = vdwg.mxu0
      %403 = vmatpush.bf16.msra.mxu0 0
      %404 = vmatpush.bf16.msra.mxu0 0
      %405 = vmatpush.bf16.msra.mxu0 0
      %406 = vmatpush.bf16.msra.mxu0 0
      %407 = vmatpush.bf16.msra.mxu0 0
      %408 = vmatpush.bf16.msra.mxu0 0
      %409 = vmatpush.bf16.msra.mxu0 0
      %410 = vmatpush.bf16.msra.mxu0 %v319
      %411 = vmatmul.bf16.gmra.mxu0 %v305
      %v412 = vpop.f32.mrf.mxu0
      %v413 = vadd.f32 0.0, %v412
      %v414 = vpop.f32.mrf.mxu0
      %v415 = vadd.f32 0.0, %v414
      %416 = vmatmul.bf16.gmra.mxu0 %v308
      %v417 = vpop.f32.mrf.mxu0
      %v418 = vadd.f32 0.0, %v417
      %v419 = vpop.f32.mrf.mxu0
      %v420 = vadd.f32 0.0, %v419
      %421 = vdwg.mxu0
      %422 = vmatpush.bf16.msra.mxu0 0
      %423 = vmatpush.bf16.msra.mxu0 0
      %424 = vmatpush.bf16.msra.mxu0 0
      %425 = vmatpush.bf16.msra.mxu0 0
      %426 = vmatpush.bf16.msra.mxu0 0
      %427 = vmatpush.bf16.msra.mxu0 0
      %428 = vmatpush.bf16.msra.mxu0 0
      %429 = vmatpush.bf16.msra.mxu0 %v321
      %430 = vmatmul.bf16.gmra.mxu0 %v305
      %v431 = vpop.f32.mrf.mxu0
      %v432 = vadd.f32 0.0, %v431
      %v433 = vpop.f32.mrf.mxu0
      %v434 = vadd.f32 0.0, %v433
      %435 = vmatmul.bf16.gmra.mxu0 %v308
      %v436 = vpop.f32.mrf.mxu0
      %v437 = vadd.f32 0.0, %v436
      %v438 = vpop.f32.mrf.mxu0
      %v439 = vadd.f32 0.0, %v438
      %440 = vdwg.mxu0
      %441 = vmatpush.bf16.msra.mxu0 0
      %442 = vmatpush.bf16.msra.mxu0 0
      %443 = vmatpush.bf16.msra.mxu0 0
      %444 = vmatpush.bf16.msra.mxu0 0
      %445 = vmatpush.bf16.msra.mxu0 0
      %446 = vmatpush.bf16.msra.mxu0 0
      %447 = vmatpush.bf16.msra.mxu0 0
      %448 = vmatpush.bf16.msra.mxu0 %v323
      %449 = vmatmul.bf16.gmra.mxu0 %v305
      %v450 = vpop.f32.mrf.mxu0
      %v451 = vadd.f32 0.0, %v450
      %v452 = vpop.f32.mrf.mxu0
      %v453 = vadd.f32 0.0, %v452
      %454 = vmatmul.bf16.gmra.mxu0 %v308
      %v455 = vpop.f32.mrf.mxu0
      %v456 = vadd.f32 0.0, %v455
      %v457 = vpop.f32.mrf.mxu0
      %v458 = vadd.f32 0.0, %v457
      %459 = vdwg.mxu0
      %460 = vmatpush.bf16.msra.mxu0 0
      %461 = vmatpush.bf16.msra.mxu0 0
      %462 = vmatpush.bf16.msra.mxu0 0
      %463 = vmatpush.bf16.msra.mxu0 0
      %464 = vmatpush.bf16.msra.mxu0 0
      %465 = vmatpush.bf16.msra.mxu0 0
      %466 = vmatpush.bf16.msra.mxu0 0
      %467 = vmatpush.bf16.msra.mxu0 %v325
      %468 = vmatmul.bf16.gmra.mxu0 %v305
      %v469 = vpop.f32.mrf.mxu0
      %v470 = vadd.f32 0.0, %v469
      %v471 = vpop.f32.mrf.mxu0
      %v472 = vadd.f32 0.0, %v471
      %473 = vmatmul.bf16.gmra.mxu0 %v308
      %v474 = vpop.f32.mrf.mxu0
      %v475 = vadd.f32 0.0, %v474
      %v476 = vpop.f32.mrf.mxu0
      %v477 = vadd.f32 0.0, %v476
      %478 = vdwg.mxu0
      %v479 = vlaneseq
      %v480 = vand.u32 %v479, 127
      %v481 = vadd.s32 %v480, 128
      %v482 = vadd.s32 %v480, 256
      %v483 = vadd.s32 %v480, 384
      %v484 = vadd.s32 %v480, 512
      %v485 = vadd.s32 %v480, 640
      %v486 = vadd.s32 %v480, 768
      %v487 = vadd.s32 %v480, 896
      %s488 = smul.u32 %s20, 1024
      %v489 = vstv %s488
      %v490 = vadd.s32 %v480, %v489
      %v491 = vadd.s32 %v481, %v489
      %v492 = vadd.s32 %v482, %v489
      %v493 = vadd.s32 %v483, %v489
      %v494 = vadd.s32 %v484, %v489
      %v495 = vadd.s32 %v485, %v489
      %v496 = vadd.s32 %v486, %v489
      %v497 = vadd.s32 %v487, %v489
      %vm498 = vcmp.lt.s32.totalorder %v490, 0
      %v499 = vsub.s32 0, %v490
      %v500 = vsel %vm498, %v499, %v490
      %v501 = vshrl.u32 %v500, 1
      %v502 = vand.u32 %v500, 1
      %v503 = vsub.s32 0, %v502
      %v504 = vsel %vm498, %v503, %v502
      %vm505 = vcmp.lt.s32.totalorder %v491, 0
      %v506 = vsub.s32 0, %v491
      %v507 = vsel %vm505, %v506, %v491
      %v508 = vshrl.u32 %v507, 1
      %v509 = vand.u32 %v507, 1
      %v510 = vsub.s32 0, %v509
      %v511 = vsel %vm505, %v510, %v509
      %vm512 = vcmp.lt.s32.totalorder %v492, 0
      %v513 = vsub.s32 0, %v492
      %v514 = vsel %vm512, %v513, %v492
      %v515 = vshrl.u32 %v514, 1
      %v516 = vand.u32 %v514, 1
      %v517 = vsub.s32 0, %v516
      %v518 = vsel %vm512, %v517, %v516
      %vm519 = vcmp.lt.s32.totalorder %v493, 0
      %v520 = vsub.s32 0, %v493
      %v521 = vsel %vm519, %v520, %v493
      %v522 = vshrl.u32 %v521, 1
      %v523 = vand.u32 %v521, 1
      %v524 = vsub.s32 0, %v523
      %v525 = vsel %vm519, %v524, %v523
      %vm526 = vcmp.lt.s32.totalorder %v494, 0
      %v527 = vsub.s32 0, %v494
      %v528 = vsel %vm526, %v527, %v494
      %v529 = vshrl.u32 %v528, 1
      %v530 = vand.u32 %v528, 1
      %v531 = vsub.s32 0, %v530
      %v532 = vsel %vm526, %v531, %v530
      %vm533 = vcmp.lt.s32.totalorder %v495, 0
      %v534 = vsub.s32 0, %v495
      %v535 = vsel %vm533, %v534, %v495
      %v536 = vshrl.u32 %v535, 1
      %v537 = vand.u32 %v535, 1
      %v538 = vsub.s32 0, %v537
      %v539 = vsel %vm533, %v538, %v537
      %vm540 = vcmp.lt.s32.totalorder %v496, 0
      %v541 = vsub.s32 0, %v496
      %v542 = vsel %vm540, %v541, %v496
      %v543 = vshrl.u32 %v542, 1
      %v544 = vand.u32 %v542, 1
      %v545 = vsub.s32 0, %v544
      %v546 = vsel %vm540, %v545, %v544
      %vm547 = vcmp.lt.s32.totalorder %v497, 0
      %v548 = vsub.s32 0, %v497
      %v549 = vsel %vm547, %v548, %v497
      %v550 = vshrl.u32 %v549, 1
      %v551 = vand.u32 %v549, 1
      %v552 = vsub.s32 0, %v551
      %v553 = vsel %vm547, %v552, %v551
      %vm554 = vcmp.ne.s32.totalorder %v504, 0
      %vm555 = vcmp.ne.s32.totalorder %v511, 0
      %vm556 = vcmp.ne.s32.totalorder %v518, 0
      %vm557 = vcmp.ne.s32.totalorder %v525, 0
      %vm558 = vcmp.ne.s32.totalorder %v532, 0
      %vm559 = vcmp.ne.s32.totalorder %v539, 0
      %vm560 = vcmp.ne.s32.totalorder %v546, 0
      %vm561 = vcmp.ne.s32.totalorder %v553, 0
      %vm562 = vcmp.lt.s32.totalorder %v504, 0
      %vm563 = vcmp.lt.s32.totalorder %v511, 0
      %vm564 = vcmp.lt.s32.totalorder %v518, 0
      %vm565 = vcmp.lt.s32.totalorder %v525, 0
      %vm566 = vcmp.lt.s32.totalorder %v532, 0
      %vm567 = vcmp.lt.s32.totalorder %v539, 0
      %vm568 = vcmp.lt.s32.totalorder %v546, 0
      %vm569 = vcmp.lt.s32.totalorder %v553, 0
      %vm570 = vmand %vm562, %vm554
      %vm571 = vmand %vm563, %vm555
      %vm572 = vmand %vm564, %vm556
      %vm573 = vmand %vm565, %vm557
      %vm574 = vmand %vm566, %vm558
      %vm575 = vmand %vm567, %vm559
      %vm576 = vmand %vm568, %vm560
      %vm577 = vmand %vm569, %vm561
      %v578 = vadd.s32 %v504, 2
      %v579 = vadd.s32 %v511, 2
      %v580 = vadd.s32 %v518, 2
      %v581 = vadd.s32 %v525, 2
      %v582 = vadd.s32 %v532, 2
      %v583 = vadd.s32 %v539, 2
      %v584 = vadd.s32 %v546, 2
      %v585 = vadd.s32 %v553, 2
      %v586 = vsel %vm570, %v578, %v504
      %v587 = vsel %vm571, %v579, %v511
      %v588 = vsel %vm572, %v580, %v518
      %v589 = vsel %vm573, %v581, %v525
      %v590 = vsel %vm574, %v582, %v532
      %v591 = vsel %vm575, %v583, %v539
      %v592 = vsel %vm576, %v584, %v546
      %v593 = vsel %vm577, %v585, %v553
      %vm594 = vcmp.eq.s32.totalorder %v586, 1
      %vm595 = vcmp.eq.s32.totalorder %v587, 1
      %vm596 = vcmp.eq.s32.totalorder %v588, 1
      %vm597 = vcmp.eq.s32.totalorder %v589, 1
      %vm598 = vcmp.eq.s32.totalorder %v590, 1
      %vm599 = vcmp.eq.s32.totalorder %v591, 1
      %vm600 = vcmp.eq.s32.totalorder %v592, 1
      %vm601 = vcmp.eq.s32.totalorder %v593, 1
      %vm602 = vcmp.lt.s32.totalorder %v490, 0
      %v603 = vsub.s32 0, %v490
      %v604 = vsel %vm602, %v603, %v490
      %v605 = vshrl.u32 %v604, 6
      %v606 = vand.u32 %v604, 63
      %v607 = vsub.s32 0, %v606
      %v608 = vsel %vm602, %v607, %v606
      %vm609 = vcmp.lt.s32.totalorder %v491, 0
      %v610 = vsub.s32 0, %v491
      %v611 = vsel %vm609, %v610, %v491
      %v612 = vshrl.u32 %v611, 6
      %v613 = vand.u32 %v611, 63
      %v614 = vsub.s32 0, %v613
      %v615 = vsel %vm609, %v614, %v613
      %vm616 = vcmp.lt.s32.totalorder %v492, 0
      %v617 = vsub.s32 0, %v492
      %v618 = vsel %vm616, %v617, %v492
      %v619 = vshrl.u32 %v618, 6
      %v620 = vand.u32 %v618, 63
      %v621 = vsub.s32 0, %v620
      %v622 = vsel %vm616, %v621, %v620
      %vm623 = vcmp.lt.s32.totalorder %v493, 0
      %v624 = vsub.s32 0, %v493
      %v625 = vsel %vm623, %v624, %v493
      %v626 = vshrl.u32 %v625, 6
      %v627 = vand.u32 %v625, 63
      %v628 = vsub.s32 0, %v627
      %v629 = vsel %vm623, %v628, %v627
      %vm630 = vcmp.lt.s32.totalorder %v494, 0
      %v631 = vsub.s32 0, %v494
      %v632 = vsel %vm630, %v631, %v494
      %v633 = vshrl.u32 %v632, 6
      %v634 = vand.u32 %v632, 63
      %v635 = vsub.s32 0, %v634
      %v636 = vsel %vm630, %v635, %v634
      %vm637 = vcmp.lt.s32.totalorder %v495, 0
      %v638 = vsub.s32 0, %v495
      %v639 = vsel %vm637, %v638, %v495
      %v640 = vshrl.u32 %v639, 6
      %v641 = vand.u32 %v639, 63
      %v642 = vsub.s32 0, %v641
      %v643 = vsel %vm637, %v642, %v641
      %vm644 = vcmp.lt.s32.totalorder %v496, 0
      %v645 = vsub.s32 0, %v496
      %v646 = vsel %vm644, %v645, %v496
      %v647 = vshrl.u32 %v646, 6
      %v648 = vand.u32 %v646, 63
      %v649 = vsub.s32 0, %v648
      %v650 = vsel %vm644, %v649, %v648
      %vm651 = vcmp.lt.s32.totalorder %v497, 0
      %v652 = vsub.s32 0, %v497
      %v653 = vsel %vm651, %v652, %v497
      %v654 = vshrl.u32 %v653, 6
      %v655 = vand.u32 %v653, 63
      %v656 = vsub.s32 0, %v655
      %v657 = vsel %vm651, %v656, %v655
      %vm658 = vcmp.ne.s32.totalorder %v608, 0
      %vm659 = vcmp.ne.s32.totalorder %v615, 0
      %vm660 = vcmp.ne.s32.totalorder %v622, 0
      %vm661 = vcmp.ne.s32.totalorder %v629, 0
      %vm662 = vcmp.ne.s32.totalorder %v636, 0
      %vm663 = vcmp.ne.s32.totalorder %v643, 0
      %vm664 = vcmp.ne.s32.totalorder %v650, 0
      %vm665 = vcmp.ne.s32.totalorder %v657, 0
      %vm666 = vcmp.lt.s32.totalorder %v608, 0
      %vm667 = vcmp.lt.s32.totalorder %v615, 0
      %vm668 = vcmp.lt.s32.totalorder %v622, 0
      %vm669 = vcmp.lt.s32.totalorder %v629, 0
      %vm670 = vcmp.lt.s32.totalorder %v636, 0
      %vm671 = vcmp.lt.s32.totalorder %v643, 0
      %vm672 = vcmp.lt.s32.totalorder %v650, 0
      %vm673 = vcmp.lt.s32.totalorder %v657, 0
      %vm674 = vmand %vm666, %vm658
      %vm675 = vmand %vm667, %vm659
      %vm676 = vmand %vm668, %vm660
      %vm677 = vmand %vm669, %vm661
      %vm678 = vmand %vm670, %vm662
      %vm679 = vmand %vm671, %vm663
      %vm680 = vmand %vm672, %vm664
      %vm681 = vmand %vm673, %vm665
      %v682 = vadd.s32 %v608, 64
      %v683 = vadd.s32 %v615, 64
      %v684 = vadd.s32 %v622, 64
      %v685 = vadd.s32 %v629, 64
      %v686 = vadd.s32 %v636, 64
      %v687 = vadd.s32 %v643, 64
      %v688 = vadd.s32 %v650, 64
      %v689 = vadd.s32 %v657, 64
      %v690 = vsel %vm674, %v682, %v608
      %v691 = vsel %vm675, %v683, %v615
      %v692 = vsel %vm676, %v684, %v622
      %v693 = vsel %vm677, %v685, %v629
      %v694 = vsel %vm678, %v686, %v636
      %v695 = vsel %vm679, %v687, %v643
      %v696 = vsel %vm680, %v688, %v650
      %v697 = vsel %vm681, %v689, %v657
      %vm698 = vcmp.ge.s32.totalorder %v690, 32
      %vm699 = vcmp.ge.s32.totalorder %v691, 32
      %vm700 = vcmp.ge.s32.totalorder %v692, 32
      %vm701 = vcmp.ge.s32.totalorder %v693, 32
      %vm702 = vcmp.ge.s32.totalorder %v694, 32
      %vm703 = vcmp.ge.s32.totalorder %v695, 32
      %vm704 = vcmp.ge.s32.totalorder %v696, 32
      %vm705 = vcmp.ge.s32.totalorder %v697, 32
      %v706 = vsel %vm594, 1, 0
      %v707 = vsel %vm595, 1, 0
      %v708 = vsel %vm596, 1, 0
      %v709 = vsel %vm597, 1, 0
      %v710 = vsel %vm598, 1, 0
      %v711 = vsel %vm599, 1, 0
      %v712 = vsel %vm600, 1, 0
      %v713 = vsel %vm601, 1, 0
      %vm714 = vcmp.eq.s32.totalorder %v706, 1
      %vm715 = vcmp.eq.s32.totalorder %v707, 1
      %vm716 = vcmp.eq.s32.totalorder %v708, 1
      %vm717 = vcmp.eq.s32.totalorder %v709, 1
      %vm718 = vcmp.eq.s32.totalorder %v710, 1
      %vm719 = vcmp.eq.s32.totalorder %v711, 1
      %vm720 = vcmp.eq.s32.totalorder %v712, 1
      %vm721 = vcmp.eq.s32.totalorder %v713, 1
      %v722 = vsel %vm714, %v339, %v337
      %v723 = vsel %vm715, %v358, %v356
      %v724 = vsel %vm716, %v377, %v375
      %v725 = vsel %vm717, %v396, %v394
      %v726 = vsel %vm718, %v415, %v413
      %v727 = vsel %vm719, %v434, %v432
      %v728 = vsel %vm720, %v453, %v451
      %v729 = vsel %vm721, %v472, %v470
      %v730 = vsel %vm714, %v344, %v342
      %v731 = vsel %vm715, %v363, %v361
      %v732 = vsel %vm716, %v382, %v380
      %v733 = vsel %vm717, %v401, %v399
      %v734 = vsel %vm718, %v420, %v418
      %v735 = vsel %vm719, %v439, %v437
      %v736 = vsel %vm720, %v458, %v456
      %v737 = vsel %vm721, %v477, %v475
      %v738 = vsel %vm698, 1, 0
      %v739 = vsel %vm699, 1, 0
      %v740 = vsel %vm700, 1, 0
      %v741 = vsel %vm701, 1, 0
      %v742 = vsel %vm702, 1, 0
      %v743 = vsel %vm703, 1, 0
      %v744 = vsel %vm704, 1, 0
      %v745 = vsel %vm705, 1, 0
      %vm746 = vcmp.eq.s32.totalorder %v738, 1
      %vm747 = vcmp.eq.s32.totalorder %v739, 1
      %vm748 = vcmp.eq.s32.totalorder %v740, 1
      %vm749 = vcmp.eq.s32.totalorder %v741, 1
      %vm750 = vcmp.eq.s32.totalorder %v742, 1
      %vm751 = vcmp.eq.s32.totalorder %v743, 1
      %vm752 = vcmp.eq.s32.totalorder %v744, 1
      %vm753 = vcmp.eq.s32.totalorder %v745, 1
      %v754 = vsel %vm746, %v730, %v722
      %v755 = vsel %vm747, %v731, %v723
      %v756 = vsel %vm748, %v732, %v724
      %v757 = vsel %vm749, %v733, %v725
      %v758 = vsel %vm750, %v734, %v726
      %v759 = vsel %vm751, %v735, %v727
      %v760 = vsel %vm752, %v736, %v728
      %v761 = vsel %vm753, %v737, %v729
      %v762 = vld [vmem:[%s3] sm:$0xff]
      %764 = vset.pattern.permute.xlu0 0
      %765 = vperm.xlu0 %764, %v762
      %v766 = vpop.permute.xlu0 %765
      %v768 = vadd.f32 %v754, %v766
      %v769 = vadd.f32 %v755, %v766
      %v770 = vadd.f32 %v756, %v766
      %v771 = vadd.f32 %v757, %v766
      %v772 = vadd.f32 %v758, %v766
      %v773 = vadd.f32 %v759, %v766
      %v774 = vadd.f32 %v760, %v766
      %v775 = vadd.f32 %v761, %v766
      %v776 = vld [vmem:[%s261] sm:$0xff]
      %v777 = vld [vmem:[%s261 + $0x8] sm:$0xff]
      %v778 = vld [vmem:[%s261 + $0x10] sm:$0xff]
      %v779 = vld [vmem:[%s261 + $0x18] sm:$0xff]
      %v780 = vld [vmem:[%s261 + $0x20] sm:$0xff]
      %v781 = vld [vmem:[%s261 + $0x28] sm:$0xff]
      %v782 = vld [vmem:[%s261 + $0x30] sm:$0xff]
      %v783 = vld [vmem:[%s261 + $0x38] sm:$0xff]
      %784 = vst [vmem:[%s271] sm:$0xff] %v776
      %785 = vst [vmem:[%s271 + $0x8] sm:$0xff] %v777
      %786 = vst [vmem:[%s271 + $0x10] sm:$0xff] %v778
      %787 = vst [vmem:[%s271 + $0x18] sm:$0xff] %v779
      %788 = vst [vmem:[%s271 + $0x20] sm:$0xff] %v780
      %789 = vst [vmem:[%s271 + $0x28] sm:$0xff] %v781
      %790 = vst [vmem:[%s271 + $0x30] sm:$0xff] %v782
      %791 = vst [vmem:[%s271 + $0x38] sm:$0xff] %v783
      %792 = vst [vmem:[%s271 + $0x40] sm:$0xff] %v768
      %793 = vst [vmem:[%s271 + $0x48] sm:$0xff] %v769
      %794 = vst [vmem:[%s271 + $0x50] sm:$0xff] %v770
      %795 = vst [vmem:[%s271 + $0x58] sm:$0xff] %v771
      %796 = vst [vmem:[%s271 + $0x60] sm:$0xff] %v772
      %797 = vst [vmem:[%s271 + $0x68] sm:$0xff] %v773
      %798 = vst [vmem:[%s271 + $0x70] sm:$0xff] %v774
      %799 = vst [vmem:[%s271 + $0x78] sm:$0xff] %v775
      %s800 = smul.u32 8, %s20
      %p801 = scmp.lt.s32.totalorder %s19, 1
      %s802 = scalar_select %p801, %s19, 1
      %p803 = scmp.lt.s32.totalorder %s800, 7
      %s804 = scalar_select %p803, %s800, 7
      %s805 = smul.addr %s802, 16
      %s806 = sadd.s32 %s804, %s805
      %s807 = smul.addr %s806, 8
      %s808 = scalar_lea.vmem %s4, %s807
      // Predicated region
      $region37: #{upconv_forward.1} parent=35 // pred_check
        %p809 = pneg %p145
      $region38: #{upconv_forward.1} parent=35 // pred_check_branch
        %811 = sbr.rel (%p809) target = $region40
      $region39: #{upconv_forward.1} parent=35 // pred_region
        %s812 = smul.u32 8, %s20
      $region40: #{upconv_forward.1} parent=35 // pred_fallthru
        _
    $region36: #{upconv_forward.1} parent=5 // pred_fallthru
      _
    %p813 = scmp.le.s32.totalorder 2, %s10
    // Predicated region
    $region41: #{upconv_forward.1} parent=5 // pred_check
      %p814 = pneg %p813
    $region42: #{upconv_forward.1} parent=5 // pred_check_branch
      %816 = sbr.rel (%p814) target = $region44
    $region43: #{upconv_forward.1} parent=5 // pred_region
      %s817 = ssub.s32 %s10, 2
      // Predicated region
      $region45: #{upconv_forward.1} parent=43 // pred_check
        %p818 = pneg %p151
      $region46: #{upconv_forward.1} parent=43 // pred_check_branch
        %820 = sbr.rel (%p818) target = $region48
      $region47: #{upconv_forward.1} parent=43 // pred_region
        %s821 = smul.u32 8, %s22
        %p822 = scmp.lt.s32.totalorder %s21, 1
        %s823 = scalar_select %p822, %s21, 1
        %p824 = scmp.lt.s32.totalorder %s821, 7
        %s825 = scalar_select %p824, %s821, 7
        %s826 = smul.addr %s823, 16
        %s827 = sadd.s32 %s825, %s826
        %s828 = smul.addr %s827, 8
        %s829 = scalar_lea.vmem %s4, %s828
      $region48: #{upconv_forward.1} parent=43 // pred_fallthru
        _
    $region44: #{upconv_forward.1} parent=5 // pred_fallthru
      _
  $region6: #{upconv_forward.1} parent=0 // loop_footer
    %s14 = sadd.s32 1, %s10
  $region7: #{upconv_forward.1} parent=0 // loop_footer_branch
    %9 = sbr.rel target = $region3
  $region8: #{upconv_forward.1} parent=0 // loop_exit
    _

</llo_original>
